<compile_context>
chip_gen: v7x
topology: tpu7x:2x2x1
jax: 0.10.0
libtpu: 0.0.40
codegen_flags: <defaults>
</compile_context>

<pallas_src>
import functools

import jax
import jax.numpy as jnp
from jax.experimental import pallas as pl
from jax.experimental.pallas import tpu as pltpu

# ----------------------------- configuration -------------------------------
N_MODELS = 3          # number of frozen sub-siamese-models
CF_SIZE = 64          # models[0].cf_size
FEAT = 2 * CF_SIZE    # sub-model feature length (so Linear(2*cf, 2*cf) is valid)
BATCH = 2
D_IN = 32             # raw input dim fed to the (synthetic) sub-models
EPS = 1e-5            # nn.BatchNorm1d default eps
DTYPE = jnp.float32

# ----------------------- packed parameter slab layout -----------------------
LANES = 128                               # slab lane width (= FEAT)
WLT_ROW = 0                               # rows [0,128): Linear weight, pre-T
BL_ROW = FEAT                             # row 128: Linear bias (1,128)
MISC_ROW = ((FEAT + 1 + 7) // 8) * 8      # 136 (sublane-aligned misc block)
W2_ROW = MISC_ROW + 32                    # 168
W3_ROW = W2_ROW + 32                      # 200
W4_ROW = W3_ROW + 32                      # 232
PSLAB_ROWS = W4_ROW + 32                  # 264 (multiple of 8)
# misc block (rows MISC_ROW..MISC_ROW+32):
#   cols 0..2 : w1 (32, n_models)      col 3 : w5^T column (32,)
#   cols 4..7 : b1..b4 (32,) each      [MISC_ROW, 8] : b5 scalar


# ------------------------------ Pallas kernel ------------------------------
def cross_siamese_kernel(feats_ref, p_ref, out_ref, *, batch, feat, n_models):
    inv_n = 1.0 / (batch * feat)          # 1/(N*L) for per-channel conv BN

    def bn_rows(h):
        # Train-mode BatchNorm1d in (C, B*L) layout: per-row (lane) stats.
        # Single pass: s1/s2 are independent lane reductions; mul by inv_n.
        s1 = jnp.sum(h, axis=-1, keepdims=True)
        s2 = jnp.sum(h * h, axis=-1, keepdims=True)
        mean = s1 * inv_n
        var = s2 * inv_n - mean * mean
        return (h - mean) * jax.lax.rsqrt(var + EPS)   # gamma=1, beta=0

    def conv_block(xin, w, b):
        # Conv1d(kernel_size=1) == (O,C)@(C,B*L) + bias, then ReLU, then BN.
        h = jnp.dot(w, xin, preferred_element_type=jnp.float32) + b
        return bn_rows(jnp.maximum(h, 0.0))

    # (B, M, F) -> (M, B*F), b-major lanes: lane-concat of per-batch tiles.
    x = jnp.concatenate([feats_ref[b] for b in range(batch)], axis=-1)

    m0 = MISC_ROW
    w1 = p_ref[m0:m0 + 32, 0:n_models]        # (32, n_models)
    b1 = p_ref[m0:m0 + 32, 4:5]               # (32, 1)
    b2 = p_ref[m0:m0 + 32, 5:6]
    b3 = p_ref[m0:m0 + 32, 6:7]
    b4 = p_ref[m0:m0 + 32, 7:8]
    w5c = p_ref[m0:m0 + 32, 3:4]              # (32, 1)  conv5 weight column
    b5 = p_ref[m0:m0 + 1, 8:9]                # (1, 1)

    y1 = conv_block(x, w1, b1)                                    # (32, B*F)
    y2 = conv_block(y1, p_ref[W2_ROW:W2_ROW + 32, 0:32], b2)
    y3 = conv_block(y2 + y1, p_ref[W3_ROW:W3_ROW + 32, 0:32], b3)  # residual0
    y4 = conv_block(y3, p_ref[W4_ROW:W4_ROW + 32, 0:32], b4)

    # conv5: (1,32) weight -> VPU broadcast-multiply + sublane reduce
    # (avoids a 1-row MXU matmul).
    x5 = y4 + y3                                                   # residual1
    h5 = jnp.sum(x5 * w5c, axis=0, keepdims=True) + b5             # (1, B*F)
    y5 = bn_rows(jnp.maximum(h5, 0.0))                             # (1, B*F)

    # LinearBlock: Flatten -> Linear -> ReLU -> BatchNorm1d(batch stats).
    # B independent (1,F)@(F,F) dots on vreg-aligned lane slices of y5
    # (no lane->sublane reshape of the conv5 row).
    wl_t = p_ref[WLT_ROW:WLT_ROW + feat, :]                        # (F, F)
    bl = p_ref[BL_ROW:BL_ROW + 1, :]                               # (1, F)
    lins = []
    for b in range(batch):
        zb = y5[:, b * feat:(b + 1) * feat]                        # (1, F)
        lb = jnp.dot(zb, wl_t, preferred_element_type=jnp.float32) + bl
        lins.append(jnp.maximum(lb, 0.0))

    # BatchNorm1d over the batch dimension (per-feature stats), single-pass.
    inv_b = 1.0 / batch
    s1 = lins[0]
    s2 = lins[0] * lins[0]
    for lb in lins[1:]:
        s1 = s1 + lb
        s2 = s2 + lb * lb
    mean = s1 * inv_b
    var = s2 * inv_b - mean * mean
    scale = jax.lax.rsqrt(var + EPS)
    for b in range(batch):
        out_ref[b:b + 1, :] = (lins[b] - mean) * scale


def cross_siamese_forward(feats_bmf, pslab):
    """feats_bmf: stacked sub-model features, shape (B, n_models, 2*cf_size)."""
    b, m, f = feats_bmf.shape
    assert f == FEAT and pslab.shape == (PSLAB_ROWS, LANES)
    kernel = functools.partial(cross_siamese_kernel, batch=b, feat=f, n_models=m)
    vmem = pl.BlockSpec(memory_space=pltpu.MemorySpace.VMEM)
    return pl.pallas_call(
        kernel,
        out_shape=jax.ShapeDtypeStruct((b, f), DTYPE),
        in_specs=[vmem, vmem],          # only 2 inputs: activations + param slab
        out_specs=vmem,
    )(feats_bmf, pslab)


# --------------------------- parameter creation -----------------------------
def xavier_uniform(key, shape_out_in):
    fan_out, fan_in = shape_out_in
    bound = (6.0 / (fan_in + fan_out)) ** 0.5
    return jax.random.uniform(key, shape_out_in, DTYPE, -bound, bound)


def init_params(key):
    ks = jax.random.split(key, 7)
    params = {
        "w1": xavier_uniform(ks[0], (32, N_MODELS)), "b1": jnp.full((32,), 0.01, DTYPE),
        "w2": xavier_uniform(ks[1], (32, 32)),       "b2": jnp.full((32,), 0.01, DTYPE),
        "w3": xavier_uniform(ks[2], (32, 32)),       "b3": jnp.full((32,), 0.01, DTYPE),
        "w4": xavier_uniform(ks[3], (32, 32)),       "b4": jnp.full((32,), 0.01, DTYPE),
        "w5": xavier_uniform(ks[4], (1, 32)),        "b5": jnp.full((1,), 0.01, DTYPE),
        "wl": xavier_uniform(ks[5], (FEAT, FEAT)),   "bl": jnp.full((FEAT,), 0.01, DTYPE),
    }
    # Synthetic frozen sub-models: feat_i = tanh(x @ P_i + q_i) -> (B, 2*cf_size)
    # TODO(synk): the real sub-model forward_once() architectures are not given;
    # they are modeled as frozen tanh projections (plain-JAX glue).
    sub_keys = jax.random.split(ks[6], N_MODELS)
    params["sub_P"] = jnp.stack(
        [xavier_uniform(k, (FEAT, D_IN)).T for k in sub_keys])     # (M, D_IN, FEAT)
    params["sub_q"] = jnp.full((N_MODELS, FEAT), 0.01, DTYPE)
    return params


def pack_params(p):
    """Host-side one-time packing of all weights/biases into one (264,128) slab."""
    slab = jnp.zeros((PSLAB_ROWS, LANES), DTYPE)
    slab = slab.at[WLT_ROW:WLT_ROW + FEAT, :].set(p["wl"].T)   # pre-transposed
    slab = slab.at[BL_ROW, :].set(p["bl"])
    m0 = MISC_ROW
    slab = slab.at[m0:m0 + 32, 0:N_MODELS].set(p["w1"])
    slab = slab.at[m0:m0 + 32, 3].set(p["w5"][0])
    slab = slab.at[m0:m0 + 32, 4].set(p["b1"])
    slab = slab.at[m0:m0 + 32, 5].set(p["b2"])
    slab = slab.at[m0:m0 + 32, 6].set(p["b3"])
    slab = slab.at[m0:m0 + 32, 7].set(p["b4"])
    slab = slab.at[m0, 8].set(p["b5"][0])
    slab = slab.at[W2_ROW:W2_ROW + 32, 0:32].set(p["w2"])
    slab = slab.at[W3_ROW:W3_ROW + 32, 0:32].set(p["w3"])
    slab = slab.at[W4_ROW:W4_ROW + 32, 0:32].set(p["w4"])
    return slab


def submodel_features(x, params):
    """Plain-JAX glue standing in for [m.forward_once(x) for m in models]."""
    feats = jnp.tanh(jnp.einsum("bd,mdf->bmf", x, params["sub_P"]) +
                     params["sub_q"][None, :, :])
    return feats.astype(DTYPE)                                      # (B, M, FEAT)


# ------------------------------ pure-JAX ref --------------------------------
def reference_forward(feats_bmf, params):
    def conv_block(x, w, b):                 # x: (B, C, L), w: (O, C), b: (O,)
        h = jnp.einsum("oc,bcl->bol", w, x) + b[None, :, None]
        h = jnp.maximum(h, 0.0)
        mean = jnp.mean(h, axis=(0, 2), keepdims=True)
        var = jnp.mean((h - mean) ** 2, axis=(0, 2), keepdims=True)
        return (h - mean) / jnp.sqrt(var + EPS)

    x = conv_block(feats_bmf, params["w1"], params["b1"])
    r0 = x
    x = conv_block(x, params["w2"], params["b2"])
    x = conv_block(x + r0, params["w3"], params["b3"])
    r1 = x
    x = conv_block(x, params["w4"], params["b4"])
    x = conv_block(x + r1, params["w5"], params["b5"])              # (B, 1, L)
    z = x.reshape(x.shape[0], -1)
    lin = jnp.maximum(z @ params["wl"].T + params["bl"][None, :], 0.0)
    mean = jnp.mean(lin, axis=0, keepdims=True)
    var = jnp.mean((lin - mean) ** 2, axis=0, keepdims=True)
    return (lin - mean) / jnp.sqrt(var + EPS)


# ---------------------------------- main ------------------------------------
if __name__ == "__main__":
    key = jax.random.PRNGKey(0)
    k_param, k_x = jax.random.split(key)
    params = init_params(k_param)
    pslab = pack_params(params)                          # one-time packing

    x = jax.random.normal(k_x, (BATCH, D_IN), DTYPE)
    feats = submodel_features(x, params)                 # (B, n_models, 2*cf_size)

    out = jax.block_until_ready(cross_siamese_forward(feats, pslab))
    ref = jax.block_until_ready(reference_forward(feats, params))

    assert out.shape == (BATCH, FEAT), out.shape
    assert bool(jnp.all(jnp.isfinite(out)))
    assert jnp.allclose(out, ref, rtol=2e-2, atol=2e-2), (
        float(jnp.max(jnp.abs(out - ref))))

    print("KERNEL_OK")
</pallas_src>

<mosaic_0001>
module attributes {stable_mosaic.version = 11 : i64} {
  func.func @cross_siamese_kernel(%arg0: memref<2x3x128xf32, #tpu.memory_space<vmem>>, %arg1: memref<264x128xf32, #tpu.memory_space<vmem>>, %arg2: memref<2x128xf32, #tpu.memory_space<vmem>>) attributes {dimension_semantics = [], scalar_prefetch = 0 : i64, scratch_operands = 0 : i64, tpu.core_type = #tpu.core_type<tc>} {
    %c0 = arith.constant 0 : index
    %c0_0 = arith.constant 0 : index
    %c0_1 = arith.constant 0 : index
    %0 = vector.load %arg0[%c0, %c0_0, %c0_1] : memref<2x3x128xf32, #tpu.memory_space<vmem>>, vector<1x3x128xf32>
    %1 = vector.shape_cast %0 : vector<1x3x128xf32> to vector<3x128xf32>
    %c1 = arith.constant 1 : index
    %c0_2 = arith.constant 0 : index
    %c0_3 = arith.constant 0 : index
    %2 = vector.load %arg0[%c1, %c0_2, %c0_3] : memref<2x3x128xf32, #tpu.memory_space<vmem>>, vector<1x3x128xf32>
    %3 = vector.shape_cast %2 : vector<1x3x128xf32> to vector<3x128xf32>
    %4 = tpu.concatenate %1, %3 in 1 : vector<3x128xf32>, vector<3x128xf32> -> vector<3x256xf32>
    %c136 = arith.constant 136 : index
    %c0_4 = arith.constant 0 : index
    %5 = vector.load %arg1[%c136, %c0_4] : memref<264x128xf32, #tpu.memory_space<vmem>>, vector<32x3xf32>
    %c136_5 = arith.constant 136 : index
    %c4 = arith.constant 4 : index
    %6 = vector.load %arg1[%c136_5, %c4] : memref<264x128xf32, #tpu.memory_space<vmem>>, vector<32x1xf32>
    %c136_6 = arith.constant 136 : index
    %c5 = arith.constant 5 : index
    %7 = vector.load %arg1[%c136_6, %c5] : memref<264x128xf32, #tpu.memory_space<vmem>>, vector<32x1xf32>
    %c136_7 = arith.constant 136 : index
    %c6 = arith.constant 6 : index
    %8 = vector.load %arg1[%c136_7, %c6] : memref<264x128xf32, #tpu.memory_space<vmem>>, vector<32x1xf32>
    %c136_8 = arith.constant 136 : index
    %c7 = arith.constant 7 : index
    %9 = vector.load %arg1[%c136_8, %c7] : memref<264x128xf32, #tpu.memory_space<vmem>>, vector<32x1xf32>
    %c136_9 = arith.constant 136 : index
    %c3 = arith.constant 3 : index
    %10 = vector.load %arg1[%c136_9, %c3] : memref<264x128xf32, #tpu.memory_space<vmem>>, vector<32x1xf32>
    %c136_10 = arith.constant 136 : index
    %c8 = arith.constant 8 : index
    %11 = vector.load %arg1[%c136_10, %c8] : memref<264x128xf32, #tpu.memory_space<vmem>>, vector<1x1xf32>
    %cst = arith.constant dense<0.000000e+00> : vector<32x256xf32>
    %12 = tpu.matmul %5, %4, %cst {dimension_numbers = #tpu.dot_dimension_numbers<[1], [0], [0], [1], [0, 0, 1, 1], [], []>} : vector<32x3xf32>, vector<3x256xf32>, vector<32x256xf32> -> vector<32x256xf32>
    %13 = vector.broadcast %6 : vector<32x1xf32> to vector<32x256xf32>
    %14 = arith.addf %12, %13 : vector<32x256xf32>
    %cst_11 = arith.constant 0.000000e+00 : f32
    %15 = vector.broadcast %cst_11 : f32 to vector<32x256xf32>
    %16 = arith.maximumf %14, %15 : vector<32x256xf32>
    %cst_12 = arith.constant dense<0.000000e+00> : vector<32xf32>
    %17 = vector.multi_reduction <add>, %16, %cst_12 [1] : vector<32x256xf32> to vector<32xf32>
    %18 = vector.shape_cast %17 : vector<32xf32> to vector<32x1xf32>
    %19 = arith.mulf %16, %16 : vector<32x256xf32>
    %cst_13 = arith.constant dense<0.000000e+00> : vector<32xf32>
    %20 = vector.multi_reduction <add>, %19, %cst_13 [1] : vector<32x256xf32> to vector<32xf32>
    %21 = vector.shape_cast %20 : vector<32xf32> to vector<32x1xf32>
    %cst_14 = arith.constant 3.906250e-03 : f32
    %22 = vector.broadcast %cst_14 : f32 to vector<32x1xf32>
    %23 = arith.mulf %18, %22 : vector<32x1xf32>
    %cst_15 = arith.constant 3.906250e-03 : f32
    %24 = vector.broadcast %cst_15 : f32 to vector<32x1xf32>
    %25 = arith.mulf %21, %24 : vector<32x1xf32>
    %26 = arith.mulf %23, %23 : vector<32x1xf32>
    %27 = arith.subf %25, %26 : vector<32x1xf32>
    %28 = vector.broadcast %23 : vector<32x1xf32> to vector<32x256xf32>
    %29 = arith.subf %16, %28 : vector<32x256xf32>
    %cst_16 = arith.constant 9.99999974E-6 : f32
    %30 = vector.broadcast %cst_16 : f32 to vector<32x1xf32>
    %31 = arith.addf %27, %30 : vector<32x1xf32>
    %32 = math.rsqrt %31 : vector<32x1xf32>
    %33 = vector.broadcast %32 : vector<32x1xf32> to vector<32x256xf32>
    %34 = arith.mulf %29, %33 : vector<32x256xf32>
    %c168 = arith.constant 168 : index
    %c0_17 = arith.constant 0 : index
    %35 = vector.load %arg1[%c168, %c0_17] : memref<264x128xf32, #tpu.memory_space<vmem>>, vector<32x32xf32>
    %cst_18 = arith.constant dense<0.000000e+00> : vector<32x256xf32>
    %36 = tpu.matmul %35, %34, %cst_18 {dimension_numbers = #tpu.dot_dimension_numbers<[1], [0], [0], [1], [0, 0, 1, 1], [], []>} : vector<32x32xf32>, vector<32x256xf32>, vector<32x256xf32> -> vector<32x256xf32>
    %37 = vector.broadcast %7 : vector<32x1xf32> to vector<32x256xf32>
    %38 = arith.addf %36, %37 : vector<32x256xf32>
    %cst_19 = arith.constant 0.000000e+00 : f32
    %39 = vector.broadcast %cst_19 : f32 to vector<32x256xf32>
    %40 = arith.maximumf %38, %39 : vector<32x256xf32>
    %cst_20 = arith.constant dense<0.000000e+00> : vector<32xf32>
    %41 = vector.multi_reduction <add>, %40, %cst_20 [1] : vector<32x256xf32> to vector<32xf32>
    %42 = vector.shape_cast %41 : vector<32xf32> to vector<32x1xf32>
    %43 = arith.mulf %40, %40 : vector<32x256xf32>
    %cst_21 = arith.constant dense<0.000000e+00> : vector<32xf32>
    %44 = vector.multi_reduction <add>, %43, %cst_21 [1] : vector<32x256xf32> to vector<32xf32>
    %45 = vector.shape_cast %44 : vector<32xf32> to vector<32x1xf32>
    %cst_22 = arith.constant 3.906250e-03 : f32
    %46 = vector.broadcast %cst_22 : f32 to vector<32x1xf32>
    %47 = arith.mulf %42, %46 : vector<32x1xf32>
    %cst_23 = arith.constant 3.906250e-03 : f32
    %48 = vector.broadcast %cst_23 : f32 to vector<32x1xf32>
    %49 = arith.mulf %45, %48 : vector<32x1xf32>
    %50 = arith.mulf %47, %47 : vector<32x1xf32>
    %51 = arith.subf %49, %50 : vector<32x1xf32>
    %52 = vector.broadcast %47 : vector<32x1xf32> to vector<32x256xf32>
    %53 = arith.subf %40, %52 : vector<32x256xf32>
    %cst_24 = arith.constant 9.99999974E-6 : f32
    %54 = vector.broadcast %cst_24 : f32 to vector<32x1xf32>
    %55 = arith.addf %51, %54 : vector<32x1xf32>
    %56 = math.rsqrt %55 : vector<32x1xf32>
    %57 = vector.broadcast %56 : vector<32x1xf32> to vector<32x256xf32>
    %58 = arith.mulf %53, %57 : vector<32x256xf32>
    %59 = arith.addf %58, %34 : vector<32x256xf32>
    %c200 = arith.constant 200 : index
    %c0_25 = arith.constant 0 : index
    %60 = vector.load %arg1[%c200, %c0_25] : memref<264x128xf32, #tpu.memory_space<vmem>>, vector<32x32xf32>
    %cst_26 = arith.constant dense<0.000000e+00> : vector<32x256xf32>
    %61 = tpu.matmul %60, %59, %cst_26 {dimension_numbers = #tpu.dot_dimension_numbers<[1], [0], [0], [1], [0, 0, 1, 1], [], []>} : vector<32x32xf32>, vector<32x256xf32>, vector<32x256xf32> -> vector<32x256xf32>
    %62 = vector.broadcast %8 : vector<32x1xf32> to vector<32x256xf32>
    %63 = arith.addf %61, %62 : vector<32x256xf32>
    %cst_27 = arith.constant 0.000000e+00 : f32
    %64 = vector.broadcast %cst_27 : f32 to vector<32x256xf32>
    %65 = arith.maximumf %63, %64 : vector<32x256xf32>
    %cst_28 = arith.constant dense<0.000000e+00> : vector<32xf32>
    %66 = vector.multi_reduction <add>, %65, %cst_28 [1] : vector<32x256xf32> to vector<32xf32>
    %67 = vector.shape_cast %66 : vector<32xf32> to vector<32x1xf32>
    %68 = arith.mulf %65, %65 : vector<32x256xf32>
    %cst_29 = arith.constant dense<0.000000e+00> : vector<32xf32>
    %69 = vector.multi_reduction <add>, %68, %cst_29 [1] : vector<32x256xf32> to vector<32xf32>
    %70 = vector.shape_cast %69 : vector<32xf32> to vector<32x1xf32>
    %cst_30 = arith.constant 3.906250e-03 : f32
    %71 = vector.broadcast %cst_30 : f32 to vector<32x1xf32>
    %72 = arith.mulf %67, %71 : vector<32x1xf32>
    %cst_31 = arith.constant 3.906250e-03 : f32
    %73 = vector.broadcast %cst_31 : f32 to vector<32x1xf32>
    %74 = arith.mulf %70, %73 : vector<32x1xf32>
    %75 = arith.mulf %72, %72 : vector<32x1xf32>
    %76 = arith.subf %74, %75 : vector<32x1xf32>
    %77 = vector.broadcast %72 : vector<32x1xf32> to vector<32x256xf32>
    %78 = arith.subf %65, %77 : vector<32x256xf32>
    %cst_32 = arith.constant 9.99999974E-6 : f32
    %79 = vector.broadcast %cst_32 : f32 to vector<32x1xf32>
    %80 = arith.addf %76, %79 : vector<32x1xf32>
    %81 = math.rsqrt %80 : vector<32x1xf32>
    %82 = vector.broadcast %81 : vector<32x1xf32> to vector<32x256xf32>
    %83 = arith.mulf %78, %82 : vector<32x256xf32>
    %c232 = arith.constant 232 : index
    %c0_33 = arith.constant 0 : index
    %84 = vector.load %arg1[%c232, %c0_33] : memref<264x128xf32, #tpu.memory_space<vmem>>, vector<32x32xf32>
    %cst_34 = arith.constant dense<0.000000e+00> : vector<32x256xf32>
    %85 = tpu.matmul %84, %83, %cst_34 {dimension_numbers = #tpu.dot_dimension_numbers<[1], [0], [0], [1], [0, 0, 1, 1], [], []>} : vector<32x32xf32>, vector<32x256xf32>, vector<32x256xf32> -> vector<32x256xf32>
    %86 = vector.broadcast %9 : vector<32x1xf32> to vector<32x256xf32>
    %87 = arith.addf %85, %86 : vector<32x256xf32>
    %cst_35 = arith.constant 0.000000e+00 : f32
    %88 = vector.broadcast %cst_35 : f32 to vector<32x256xf32>
    %89 = arith.maximumf %87, %88 : vector<32x256xf32>
    %cst_36 = arith.constant dense<0.000000e+00> : vector<32xf32>
    %90 = vector.multi_reduction <add>, %89, %cst_36 [1] : vector<32x256xf32> to vector<32xf32>
    %91 = vector.shape_cast %90 : vector<32xf32> to vector<32x1xf32>
    %92 = arith.mulf %89, %89 : vector<32x256xf32>
    %cst_37 = arith.constant dense<0.000000e+00> : vector<32xf32>
    %93 = vector.multi_reduction <add>, %92, %cst_37 [1] : vector<32x256xf32> to vector<32xf32>
    %94 = vector.shape_cast %93 : vector<32xf32> to vector<32x1xf32>
    %cst_38 = arith.constant 3.906250e-03 : f32
    %95 = vector.broadcast %cst_38 : f32 to vector<32x1xf32>
    %96 = arith.mulf %91, %95 : vector<32x1xf32>
    %cst_39 = arith.constant 3.906250e-03 : f32
    %97 = vector.broadcast %cst_39 : f32 to vector<32x1xf32>
    %98 = arith.mulf %94, %97 : vector<32x1xf32>
    %99 = arith.mulf %96, %96 : vector<32x1xf32>
    %100 = arith.subf %98, %99 : vector<32x1xf32>
    %101 = vector.broadcast %96 : vector<32x1xf32> to vector<32x256xf32>
    %102 = arith.subf %89, %101 : vector<32x256xf32>
    %cst_40 = arith.constant 9.99999974E-6 : f32
    %103 = vector.broadcast %cst_40 : f32 to vector<32x1xf32>
    %104 = arith.addf %100, %103 : vector<32x1xf32>
    %105 = math.rsqrt %104 : vector<32x1xf32>
    %106 = vector.broadcast %105 : vector<32x1xf32> to vector<32x256xf32>
    %107 = arith.mulf %102, %106 : vector<32x256xf32>
    %108 = arith.addf %107, %83 : vector<32x256xf32>
    %109 = vector.broadcast %10 : vector<32x1xf32> to vector<32x256xf32>
    %110 = arith.mulf %108, %109 : vector<32x256xf32>
    %cst_41 = arith.constant dense<0.000000e+00> : vector<256xf32>
    %111 = vector.multi_reduction <add>, %110, %cst_41 [0] : vector<32x256xf32> to vector<256xf32>
    %112 = vector.shape_cast %111 : vector<256xf32> to vector<1x256xf32>
    %113 = vector.broadcast %11 : vector<1x1xf32> to vector<1x256xf32>
    %114 = arith.addf %112, %113 : vector<1x256xf32>
    %cst_42 = arith.constant 0.000000e+00 : f32
    %115 = vector.broadcast %cst_42 : f32 to vector<1x256xf32>
    %116 = arith.maximumf %114, %115 : vector<1x256xf32>
    %cst_43 = arith.constant dense<0.000000e+00> : vector<1xf32>
    %117 = vector.multi_reduction <add>, %116, %cst_43 [1] : vector<1x256xf32> to vector<1xf32>
    %118 = vector.shape_cast %117 : vector<1xf32> to vector<1x1xf32>
    %119 = arith.mulf %116, %116 : vector<1x256xf32>
    %cst_44 = arith.constant dense<0.000000e+00> : vector<1xf32>
    %120 = vector.multi_reduction <add>, %119, %cst_44 [1] : vector<1x256xf32> to vector<1xf32>
    %121 = vector.shape_cast %120 : vector<1xf32> to vector<1x1xf32>
    %cst_45 = arith.constant 3.906250e-03 : f32
    %122 = vector.broadcast %cst_45 : f32 to vector<1x1xf32>
    %123 = arith.mulf %118, %122 : vector<1x1xf32>
    %cst_46 = arith.constant 3.906250e-03 : f32
    %124 = vector.broadcast %cst_46 : f32 to vector<1x1xf32>
    %125 = arith.mulf %121, %124 : vector<1x1xf32>
    %126 = arith.mulf %123, %123 : vector<1x1xf32>
    %127 = arith.subf %125, %126 : vector<1x1xf32>
    %128 = vector.broadcast %123 : vector<1x1xf32> to vector<1x256xf32>
    %129 = arith.subf %116, %128 : vector<1x256xf32>
    %cst_47 = arith.constant 9.99999974E-6 : f32
    %130 = vector.broadcast %cst_47 : f32 to vector<1x1xf32>
    %131 = arith.addf %127, %130 : vector<1x1xf32>
    %132 = math.rsqrt %131 : vector<1x1xf32>
    %133 = vector.broadcast %132 : vector<1x1xf32> to vector<1x256xf32>
    %134 = arith.mulf %129, %133 : vector<1x256xf32>
    %c0_48 = arith.constant 0 : index
    %c0_49 = arith.constant 0 : index
    %135 = vector.load %arg1[%c0_48, %c0_49] : memref<264x128xf32, #tpu.memory_space<vmem>>, vector<128x128xf32>
    %c128 = arith.constant 128 : index
    %c0_50 = arith.constant 0 : index
    %136 = vector.load %arg1[%c128, %c0_50] : memref<264x128xf32, #tpu.memory_space<vmem>>, vector<1x128xf32>
    %137 = vector.extract_strided_slice %134 {offsets = [0, 0], sizes = [1, 128], strides = [1, 1]} : vector<1x256xf32> to vector<1x128xf32>
    %cst_51 = arith.constant dense<0.000000e+00> : vector<1x128xf32>
    %138 = tpu.matmul %137, %135, %cst_51 {dimension_numbers = #tpu.dot_dimension_numbers<[1], [0], [0], [1], [0, 0, 1, 1], [], []>} : vector<1x128xf32>, vector<128x128xf32>, vector<1x128xf32> -> vector<1x128xf32>
    %139 = arith.addf %138, %136 : vector<1x128xf32>
    %cst_52 = arith.constant 0.000000e+00 : f32
    %140 = vector.broadcast %cst_52 : f32 to vector<1x128xf32>
    %141 = arith.maximumf %139, %140 : vector<1x128xf32>
    %142 = vector.extract_strided_slice %134 {offsets = [0, 128], sizes = [1, 128], strides = [1, 1]} : vector<1x256xf32> to vector<1x128xf32>
    %cst_53 = arith.constant dense<0.000000e+00> : vector<1x128xf32>
    %143 = tpu.matmul %142, %135, %cst_53 {dimension_numbers = #tpu.dot_dimension_numbers<[1], [0], [0], [1], [0, 0, 1, 1], [], []>} : vector<1x128xf32>, vector<128x128xf32>, vector<1x128xf32> -> vector<1x128xf32>
    %144 = arith.addf %143, %136 : vector<1x128xf32>
    %cst_54 = arith.constant 0.000000e+00 : f32
    %145 = vector.broadcast %cst_54 : f32 to vector<1x128xf32>
    %146 = arith.maximumf %144, %145 : vector<1x128xf32>
    %147 = arith.mulf %141, %141 : vector<1x128xf32>
    %148 = arith.addf %141, %146 : vector<1x128xf32>
    %149 = arith.mulf %146, %146 : vector<1x128xf32>
    %150 = arith.addf %147, %149 : vector<1x128xf32>
    %cst_55 = arith.constant 5.000000e-01 : f32
    %151 = vector.broadcast %cst_55 : f32 to vector<1x128xf32>
    %152 = arith.mulf %148, %151 : vector<1x128xf32>
    %cst_56 = arith.constant 5.000000e-01 : f32
    %153 = vector.broadcast %cst_56 : f32 to vector<1x128xf32>
    %154 = arith.mulf %150, %153 : vector<1x128xf32>
    %155 = arith.mulf %152, %152 : vector<1x128xf32>
    %156 = arith.subf %154, %155 : vector<1x128xf32>
    %cst_57 = arith.constant 9.99999974E-6 : f32
    %157 = vector.broadcast %cst_57 : f32 to vector<1x128xf32>
    %158 = arith.addf %156, %157 : vector<1x128xf32>
    %159 = math.rsqrt %158 : vector<1x128xf32>
    %160 = arith.subf %141, %152 : vector<1x128xf32>
    %161 = arith.mulf %160, %159 : vector<1x128xf32>
    %c0_58 = arith.constant 0 : index
    %c0_59 = arith.constant 0 : index
    %162 = vector.load %arg2[%c0_58, %c0_59] : memref<2x128xf32, #tpu.memory_space<vmem>>, vector<1x128xf32>
    tpu.vector_store %arg2[%c0_58, %c0_59], %161 {strides = array<i32>} : memref<2x128xf32, #tpu.memory_space<vmem>>, vector<1x128xf32>,
    %163 = arith.subf %146, %152 : vector<1x128xf32>
    %164 = arith.mulf %163, %159 : vector<1x128xf32>
    %c1_60 = arith.constant 1 : index
    %c0_61 = arith.constant 0 : index
    %165 = vector.load %arg2[%c1_60, %c0_61] : memref<2x128xf32, #tpu.memory_space<vmem>>, vector<1x128xf32>
    tpu.vector_store %arg2[%c1_60, %c0_61], %164 {strides = array<i32>} : memref<2x128xf32, #tpu.memory_space<vmem>>, vector<1x128xf32>,
    return
  }
}

</mosaic_0001>

<llo_original>
// kernel: tpu_custom_call.1
$region0: #{tpu_custom_call.1}
  #allocation0 [shape = 'u32[]', space=smem, size = 0x4, offset = 0x4, fixed_abs, tag = 'smem constant byte address 0x4 - core index']
  #allocation1 [shape = 'u32[144,128]{1,0:T(1,128)}', space=vmem, size = 0x12000, scoped, tag = 'internal scratch']
  %s0 = inlined_call_operand.vmem [shape: f32[2,3,128], index: 0, kind: input, shape index: {}]
  %s1 = inlined_call_operand.hbm [shape: f32[264,128], index: 1, kind: input, shape index: {}]
  %s2 = inlined_call_operand.hbm [shape: f32[2,128], index: 2, kind: output, shape index: {}]
  %s3 = sld [smem:[#allocation0]]
  $region22: #{tpu_custom_call.1} parent=0
    _
  %s5 = ssub.s32 1, %s3
  %s6 = scalar_select 0, %s5, %s3
  $region1: #{tpu_custom_call.1} parent=0
    #allocation2 [shape = 'u8[135168]{0}', space=vmem, size = 0x21000, scoped, tag = 'input window, operand 1, single buffered']
    #allocation3 [shape = 's32[1]{0}', space=sflag, size = 0x4, scoped, tag = 'scoped memory for tpu_custom_call.1']
    #allocation4 [shape = 's32[1]{0}', space=sflag, size = 0x4, scoped, tag = 'scoped memory for tpu_custom_call.1']
    #allocation5 [shape = 'u8[1024]{0}', space=vmem, size = 0x400, scoped, tag = 'output window, operand 0, single buffered']
    %7 = vsyncpa [#allocation3], 0
    %8 = vsyncpa [#allocation4], 0
    // Predicated region
    $region2: #{tpu_custom_call.1} parent=1 // pred_check
      _
    $region3: #{tpu_custom_call.1} parent=1 // pred_check_branch
      %10 = sbr.rel (0) target = $region5
    $region4: #{tpu_custom_call.1} parent=1 // pred_region
      _
    $region5: #{tpu_custom_call.1} parent=1 // pred_fallthru
      _
    // Predicated region
    $region6: #{tpu_custom_call.1} parent=1 // pred_check
      _
    $region7: #{tpu_custom_call.1} parent=1 // pred_check_branch
      %12 = sbr.rel (0) target = $region9
    $region8: #{tpu_custom_call.1} parent=1 // pred_region
      %s14 = ssub.s32 4224, 4224
      %15 = vsyncadd [#allocation3], %s14
      %s16 = sshll.u32 [#allocation2], 4
      %s17 = int_to_ptr.vmem [resolvable:$true] %s16
      %22 = dma.hbm_to_vmem [thread:$0]  %s1, 4224, %s17, [#allocation3], 128, 128, 8
    $region9: #{tpu_custom_call.1} parent=1 // pred_fallthru
      _
    // Predicated region
    $region10: #{tpu_custom_call.1} parent=1 // pred_check
      _
    $region11: #{tpu_custom_call.1} parent=1 // pred_check_branch
      %24 = sbr.rel (0) target = $region13
    $region12: #{tpu_custom_call.1} parent=1 // pred_region
      %25 = dma.done [#allocation3], 4224
    $region13: #{tpu_custom_call.1} parent=1 // pred_fallthru
      _
    %v26 = vld [vmem:[%s0] sm:$0x7]
    %s27 = scalar_lea.vmem %s0, 4
    %v28 = vld [vmem:[%s27] sm:$0x7]
    %v29 = vld [vmem:[#allocation2 + $0x88] sm:$0xff]
    %v30 = vld [vmem:[#allocation2 + $0x90] sm:$0xff]
    %v31 = vld [vmem:[#allocation2 + $0x98] sm:$0xff]
    %v32 = vld [vmem:[#allocation2 + $0xa0] sm:$0xff]
    %v33 = vld [vmem:[#allocation2 + $0x88] sm:$0x1]
    %35 = vset.pattern.permute.xlu0 4
    %36 = vperm.xlu0 %35, %v29
    %v37 = vpop.permute.xlu0 %36
    %40 = vset.pattern.permute.xlu0 4
    %41 = vperm.xlu0 %40, %v30
    %v42 = vpop.permute.xlu0 %41
    %45 = vset.pattern.permute.xlu0 4
    %46 = vperm.xlu0 %45, %v31
    %v47 = vpop.permute.xlu0 %46
    %50 = vset.pattern.permute.xlu0 4
    %51 = vperm.xlu0 %50, %v32
    %v52 = vpop.permute.xlu0 %51
    %vm54 = vcmask 23552
    %v55 = vsel %vm54, %v29, 0
    %v57 = vsel %vm54, %v30, 0
    %v59 = vsel %vm54, %v31, 0
    %v61 = vsel %vm54, %v32, 0
    %vm63 = vcmask 1042432
    %v65 = vsel %vm63, %v26, 0
    %v68 = vsel %vm63, %v28, 0
    %70 = vmatprep.subr.mxu0 %v68
    %71 = vmatpush1.msra.mxu0 %v65
    %72 = vmatprep.subr.mxu0 0.0
    %73 = vmatpush1.msra.mxu0 0.0
    %74 = vmatprep.subr.mxu0 0.0
    %75 = vmatpush1.msra.mxu0 0.0
    %76 = vmatprep.subr.mxu0 0.0
    %77 = vmatpush1.msra.mxu0 0.0
    %78 = vmatprep.subr.mxu0 0.0
    %79 = vmatpush1.msra.mxu0 0.0
    %80 = vmatprep.subr.mxu0 0.0
    %81 = vmatpush1.msra.mxu0 0.0
    %82 = vmatprep.subr.mxu0 0.0
    %83 = vmatpush1.msra.mxu0 0.0
    %84 = vmatprep.subr.mxu0 0.0
    %85 = vmatpush1.msra.mxu0 0.0
    %86 = vmatprep.subr.mxu0 0.0
    %87 = vmatpush1.msra.mxu0 0.0
    %88 = vmatprep.subr.mxu0 0.0
    %89 = vmatpush1.msra.mxu0 0.0
    %90 = vmatprep.subr.mxu0 0.0
    %91 = vmatpush1.msra.mxu0 0.0
    %92 = vmatprep.subr.mxu0 0.0
    %93 = vmatpush1.msra.mxu0 0.0
    %94 = vmatprep.subr.mxu0 0.0
    %95 = vmatpush1.msra.mxu0 0.0
    %96 = vmatprep.subr.mxu0 0.0
    %97 = vmatpush1.msra.mxu0 0.0
    %98 = vmatprep.subr.mxu0 0.0
    %99 = vmatpush1.msra.mxu0 0.0
    %100 = vmatprep.subr.mxu0 0.0
    %101 = vmatpush1.msra.mxu0 0.0
    %102 = vmatprep.subr.mxu0 0.0
    %103 = vmatpush1.msra.mxu0 0.0
    %104 = vmatprep.subr.mxu0 0.0
    %105 = vmatpush1.msra.mxu0 0.0
    %106 = vmatprep.subr.mxu0 0.0
    %107 = vmatpush1.msra.mxu0 0.0
    %108 = vmatprep.subr.mxu0 0.0
    %109 = vmatpush1.msra.mxu0 0.0
    %110 = vmatprep.subr.mxu0 0.0
    %111 = vmatpush1.msra.mxu0 0.0
    %112 = vmatprep.subr.mxu0 0.0
    %113 = vmatpush1.msra.mxu0 0.0
    %114 = vmatprep.subr.mxu0 0.0
    %115 = vmatpush1.msra.mxu0 0.0
    %116 = vmatprep.subr.mxu0 0.0
    %117 = vmatpush1.msra.mxu0 0.0
    %118 = vmatprep.subr.mxu0 0.0
    %119 = vmatpush1.msra.mxu0 0.0
    %120 = vmatprep.subr.mxu0 0.0
    %121 = vmatpush1.msra.mxu0 0.0
    %122 = vmatprep.subr.mxu0 0.0
    %123 = vmatpush1.msra.mxu0 0.0
    %124 = vmatprep.subr.mxu0 0.0
    %125 = vmatpush1.msra.mxu0 0.0
    %126 = vmatprep.subr.mxu0 0.0
    %127 = vmatpush1.msra.mxu0 0.0
    %128 = vmatprep.subr.mxu0 0.0
    %129 = vmatpush1.msra.mxu0 0.0
    %130 = vmatprep.subr.mxu0 0.0
    %131 = vmatpush1.msra.mxu0 0.0
    %132 = vmatprep.subr.mxu0 0.0
    %133 = vmatpush1.msra.mxu0 0.0
    %134 = vmatprep.mubr.f32.mxu0 0.0
    %135 = vmatmul.mubr.f32.gmra.mrb[0].mxu0 %v55
    %v136 = vpop.f32.mrb[0].mxu0
    %v137 = vadd.f32 %v37, %v136
    %v138 = vpop.f32.mrb[0].mxu0
    %v139 = vadd.f32 %v37, %v138
    %140 = vmatprep.mubr.f32.mxu0 0.0
    %141 = vmatmul.mubr.f32.gmra.mrb[0].mxu0 %v57
    %v142 = vpop.f32.mrb[0].mxu0
    %v143 = vadd.f32 %v42, %v142
    %v144 = vpop.f32.mrb[0].mxu0
    %v145 = vadd.f32 %v42, %v144
    %146 = vmatprep.mubr.f32.mxu0 0.0
    %147 = vmatmul.mubr.f32.gmra.mrb[0].mxu0 %v59
    %v148 = vpop.f32.mrb[0].mxu0
    %v149 = vadd.f32 %v47, %v148
    %v150 = vpop.f32.mrb[0].mxu0
    %v151 = vadd.f32 %v47, %v150
    %152 = vmatprep.mubr.f32.mxu0 0.0
    %153 = vmatmul.mubr.f32.gmra.mrb[0].mxu0 %v61
    %v154 = vpop.f32.mrb[0].mxu0
    %v155 = vadd.f32 %v52, %v154
    %v156 = vpop.f32.mrb[0].mxu0
    %v157 = vadd.f32 %v52, %v156
    %158 = vdwg.mxu0
    %v159 = vmax.f32 %v137, 0.0
    %v160 = vmax.f32 %v139, 0.0
    %v161 = vmax.f32 %v143, 0.0
    %v162 = vmax.f32 %v145, 0.0
    %v163 = vmax.f32 %v149, 0.0
    %v164 = vmax.f32 %v151, 0.0
    %v165 = vmax.f32 %v155, 0.0
    %v166 = vmax.f32 %v157, 0.0
    %v167 = vadd.f32 %v159, %v160
    %168 = vadd.xlane.f32.xlu0 %v167
    %v169 = vpop.xlane.xlu0 %168
    %v170 = vadd.f32 %v161, %v162
    %171 = vadd.xlane.f32.xlu0 %v170
    %v172 = vpop.xlane.xlu0 %171
    %v173 = vadd.f32 %v163, %v164
    %174 = vadd.xlane.f32.xlu0 %v173
    %v175 = vpop.xlane.xlu0 %174
    %v176 = vadd.f32 %v165, %v166
    %177 = vadd.xlane.f32.xlu0 %v176
    %v178 = vpop.xlane.xlu0 %177
    %v179 = vmul.f32 %v159, %v159
    %v180 = vmul.f32 %v160, %v160
    %v181 = vmul.f32 %v161, %v161
    %v182 = vmul.f32 %v162, %v162
    %v183 = vmul.f32 %v163, %v163
    %v184 = vmul.f32 %v164, %v164
    %v185 = vmul.f32 %v165, %v165
    %v186 = vmul.f32 %v166, %v166
    %v187 = vadd.f32 %v179, %v180
    %188 = vadd.xlane.f32.xlu0 %v187
    %v189 = vpop.xlane.xlu0 %188
    %v190 = vadd.f32 %v181, %v182
    %191 = vadd.xlane.f32.xlu0 %v190
    %v192 = vpop.xlane.xlu0 %191
    %v193 = vadd.f32 %v183, %v184
    %194 = vadd.xlane.f32.xlu0 %v193
    %v195 = vpop.xlane.xlu0 %194
    %v196 = vadd.f32 %v185, %v186
    %197 = vadd.xlane.f32.xlu0 %v196
    %v198 = vpop.xlane.xlu0 %197
    %v199 = vmul.f32 %v169, 0.00390625
    %v200 = vmul.f32 %v172, 0.00390625
    %v201 = vmul.f32 %v175, 0.00390625
    %v202 = vmul.f32 %v178, 0.00390625
    %v203 = vmul.f32 %v189, 0.00390625
    %v204 = vmul.f32 %v192, 0.00390625
    %v205 = vmul.f32 %v195, 0.00390625
    %v206 = vmul.f32 %v198, 0.00390625
    %v207 = vmul.f32 %v199, %v199
    %v208 = vmul.f32 %v200, %v200
    %v209 = vmul.f32 %v201, %v201
    %v210 = vmul.f32 %v202, %v202
    %v211 = vsub.f32 %v203, %v207
    %v212 = vsub.f32 %v204, %v208
    %v213 = vsub.f32 %v205, %v209
    %v214 = vsub.f32 %v206, %v210
    %v215 = vsub.f32 %v159, %v199
    %v216 = vsub.f32 %v160, %v199
    %v217 = vsub.f32 %v161, %v200
    %v218 = vsub.f32 %v162, %v200
    %v219 = vsub.f32 %v163, %v201
    %v220 = vsub.f32 %v164, %v201
    %v221 = vsub.f32 %v165, %v202
    %v222 = vsub.f32 %v166, %v202
    %v223 = vadd.f32 %v211, 1e-05
    %v224 = vadd.f32 %v212, 1e-05
    %v225 = vadd.f32 %v213, 1e-05
    %v226 = vadd.f32 %v214, 1e-05
    %v227 = vrsqrt.pop %v223
    %v228 = vrsqrt.pop %v224
    %v229 = vrsqrt.pop %v225
    %v230 = vrsqrt.pop %v226
    %v231 = vmul.f32 %v215, %v227
    %v232 = vmul.f32 %v216, %v227
    %v233 = vmul.f32 %v217, %v228
    %v234 = vmul.f32 %v218, %v228
    %v235 = vmul.f32 %v219, %v229
    %v236 = vmul.f32 %v220, %v229
    %v237 = vmul.f32 %v221, %v230
    %v238 = vmul.f32 %v222, %v230
    %v239 = vld [vmem:[#allocation2 + $0xa8] sm:$0xff]
    %v240 = vld [vmem:[#allocation2 + $0xb0] sm:$0xff]
    %v241 = vld [vmem:[#allocation2 + $0xb8] sm:$0xff]
    %v242 = vld [vmem:[#allocation2 + $0xc0] sm:$0xff]
    %243 = vset.pattern.permute.xlu0 5
    %244 = vperm.xlu0 %243, %v29
    %v245 = vpop.permute.xlu0 %244
    %247 = vset.pattern.permute.xlu0 5
    %248 = vperm.xlu0 %247, %v30
    %v249 = vpop.permute.xlu0 %248
    %251 = vset.pattern.permute.xlu0 5
    %252 = vperm.xlu0 %251, %v31
    %v253 = vpop.permute.xlu0 %252
    %255 = vset.pattern.permute.xlu0 5
    %256 = vperm.xlu0 %255, %v32
    %v257 = vpop.permute.xlu0 %256
    %vm259 = vcmask 261120
    %v261 = vsel %vm259, %v239, 0
    %v264 = vsel %vm259, %v240, 0
    %v267 = vsel %vm259, %v241, 0
    %v270 = vsel %vm259, %v242, 0
    %272 = vmatprep.subr.mxu0 %v232
    %273 = vmatpush1.msra.mxu0 %v231
    %274 = vmatprep.subr.mxu0 %v234
    %275 = vmatpush1.msra.mxu0 %v233
    %276 = vmatprep.subr.mxu0 %v236
    %277 = vmatpush1.msra.mxu0 %v235
    %278 = vmatprep.subr.mxu0 %v238
    %279 = vmatpush1.msra.mxu0 %v237
    %280 = vmatprep.subr.mxu0 0.0
    %281 = vmatpush1.msra.mxu0 0.0
    %282 = vmatprep.subr.mxu0 0.0
    %283 = vmatpush1.msra.mxu0 0.0
    %284 = vmatprep.subr.mxu0 0.0
    %285 = vmatpush1.msra.mxu0 0.0
    %286 = vmatprep.subr.mxu0 0.0
    %287 = vmatpush1.msra.mxu0 0.0
    %288 = vmatprep.subr.mxu0 0.0
    %289 = vmatpush1.msra.mxu0 0.0
    %290 = vmatprep.subr.mxu0 0.0
    %291 = vmatpush1.msra.mxu0 0.0
    %292 = vmatprep.subr.mxu0 0.0
    %293 = vmatpush1.msra.mxu0 0.0
    %294 = vmatprep.subr.mxu0 0.0
    %295 = vmatpush1.msra.mxu0 0.0
    %296 = vmatprep.subr.mxu0 0.0
    %297 = vmatpush1.msra.mxu0 0.0
    %298 = vmatprep.subr.mxu0 0.0
    %299 = vmatpush1.msra.mxu0 0.0
    %300 = vmatprep.subr.mxu0 0.0
    %301 = vmatpush1.msra.mxu0 0.0
    %302 = vmatprep.subr.mxu0 0.0
    %303 = vmatpush1.msra.mxu0 0.0
    %304 = vmatprep.subr.mxu0 0.0
    %305 = vmatpush1.msra.mxu0 0.0
    %306 = vmatprep.subr.mxu0 0.0
    %307 = vmatpush1.msra.mxu0 0.0
    %308 = vmatprep.subr.mxu0 0.0
    %309 = vmatpush1.msra.mxu0 0.0
    %310 = vmatprep.subr.mxu0 0.0
    %311 = vmatpush1.msra.mxu0 0.0
    %312 = vmatprep.subr.mxu0 0.0
    %313 = vmatpush1.msra.mxu0 0.0
    %314 = vmatprep.subr.mxu0 0.0
    %315 = vmatpush1.msra.mxu0 0.0
    %316 = vmatprep.subr.mxu0 0.0
    %317 = vmatpush1.msra.mxu0 0.0
    %318 = vmatprep.subr.mxu0 0.0
    %319 = vmatpush1.msra.mxu0 0.0
    %320 = vmatprep.subr.mxu0 0.0
    %321 = vmatpush1.msra.mxu0 0.0
    %322 = vmatprep.subr.mxu0 0.0
    %323 = vmatpush1.msra.mxu0 0.0
    %324 = vmatprep.subr.mxu0 0.0
    %325 = vmatpush1.msra.mxu0 0.0
    %326 = vmatprep.subr.mxu0 0.0
    %327 = vmatpush1.msra.mxu0 0.0
    %328 = vmatprep.subr.mxu0 0.0
    %329 = vmatpush1.msra.mxu0 0.0
    %330 = vmatprep.subr.mxu0 0.0
    %331 = vmatpush1.msra.mxu0 0.0
    %332 = vmatprep.subr.mxu0 0.0
    %333 = vmatpush1.msra.mxu0 0.0
    %334 = vmatprep.subr.mxu0 0.0
    %335 = vmatpush1.msra.mxu0 0.0
    %336 = vmatprep.mubr.f32.mxu0 0.0
    %337 = vmatmul.mubr.f32.gmra.mrb[0].mxu0 %v261
    %v338 = vpop.f32.mrb[0].mxu0
    %v339 = vadd.f32 %v245, %v338
    %v340 = vpop.f32.mrb[0].mxu0
    %v341 = vadd.f32 %v245, %v340
    %342 = vmatprep.mubr.f32.mxu0 0.0
    %343 = vmatmul.mubr.f32.gmra.mrb[0].mxu0 %v264
    %v344 = vpop.f32.mrb[0].mxu0
    %v345 = vadd.f32 %v249, %v344
    %v346 = vpop.f32.mrb[0].mxu0
    %v347 = vadd.f32 %v249, %v346
    %348 = vmatprep.mubr.f32.mxu0 0.0
    %349 = vmatmul.mubr.f32.gmra.mrb[0].mxu0 %v267
    %v350 = vpop.f32.mrb[0].mxu0
    %v351 = vadd.f32 %v253, %v350
    %v352 = vpop.f32.mrb[0].mxu0
    %v353 = vadd.f32 %v253, %v352
    %354 = vmatprep.mubr.f32.mxu0 0.0
    %355 = vmatmul.mubr.f32.gmra.mrb[0].mxu0 %v270
    %v356 = vpop.f32.mrb[0].mxu0
    %v357 = vadd.f32 %v257, %v356
    %v358 = vpop.f32.mrb[0].mxu0
    %v359 = vadd.f32 %v257, %v358
    %360 = vdwg.mxu0
    %v361 = vmax.f32 %v339, 0.0
    %v362 = vmax.f32 %v341, 0.0
    %v363 = vmax.f32 %v345, 0.0
    %v364 = vmax.f32 %v347, 0.0
    %v365 = vmax.f32 %v351, 0.0
    %v366 = vmax.f32 %v353, 0.0
    %v367 = vmax.f32 %v357, 0.0
    %v368 = vmax.f32 %v359, 0.0
    %v369 = vadd.f32 %v361, %v362
    %370 = vadd.xlane.f32.xlu0 %v369
    %v371 = vpop.xlane.xlu0 %370
    %v372 = vadd.f32 %v363, %v364
    %373 = vadd.xlane.f32.xlu0 %v372
    %v374 = vpop.xlane.xlu0 %373
    %v375 = vadd.f32 %v365, %v366
    %376 = vadd.xlane.f32.xlu0 %v375
    %v377 = vpop.xlane.xlu0 %376
    %v378 = vadd.f32 %v367, %v368
    %379 = vadd.xlane.f32.xlu0 %v378
    %v380 = vpop.xlane.xlu0 %379
    %v381 = vmul.f32 %v361, %v361
    %v382 = vmul.f32 %v362, %v362
    %v383 = vmul.f32 %v363, %v363
    %v384 = vmul.f32 %v364, %v364
    %v385 = vmul.f32 %v365, %v365
    %v386 = vmul.f32 %v366, %v366
    %v387 = vmul.f32 %v367, %v367
    %v388 = vmul.f32 %v368, %v368
    %v389 = vadd.f32 %v381, %v382
    %390 = vadd.xlane.f32.xlu0 %v389
    %v391 = vpop.xlane.xlu0 %390
    %v392 = vadd.f32 %v383, %v384
    %393 = vadd.xlane.f32.xlu0 %v392
    %v394 = vpop.xlane.xlu0 %393
    %v395 = vadd.f32 %v385, %v386
    %396 = vadd.xlane.f32.xlu0 %v395
    %v397 = vpop.xlane.xlu0 %396
    %v398 = vadd.f32 %v387, %v388
    %399 = vadd.xlane.f32.xlu0 %v398
    %v400 = vpop.xlane.xlu0 %399
    %v401 = vmul.f32 %v371, 0.00390625
    %v402 = vmul.f32 %v374, 0.00390625
    %v403 = vmul.f32 %v377, 0.00390625
    %v404 = vmul.f32 %v380, 0.00390625
    %v405 = vmul.f32 %v391, 0.00390625
    %v406 = vmul.f32 %v394, 0.00390625
    %v407 = vmul.f32 %v397, 0.00390625
    %v408 = vmul.f32 %v400, 0.00390625
    %v409 = vmul.f32 %v401, %v401
    %v410 = vmul.f32 %v402, %v402
    %v411 = vmul.f32 %v403, %v403
    %v412 = vmul.f32 %v404, %v404
    %v413 = vsub.f32 %v405, %v409
    %v414 = vsub.f32 %v406, %v410
    %v415 = vsub.f32 %v407, %v411
    %v416 = vsub.f32 %v408, %v412
    %v417 = vsub.f32 %v361, %v401
    %v418 = vsub.f32 %v362, %v401
    %v419 = vsub.f32 %v363, %v402
    %v420 = vsub.f32 %v364, %v402
    %v421 = vsub.f32 %v365, %v403
    %v422 = vsub.f32 %v366, %v403
    %v423 = vsub.f32 %v367, %v404
    %v424 = vsub.f32 %v368, %v404
    %v425 = vadd.f32 %v413, 1e-05
    %v426 = vadd.f32 %v414, 1e-05
    %v427 = vadd.f32 %v415, 1e-05
    %v428 = vadd.f32 %v416, 1e-05
    %v429 = vrsqrt.pop %v425
    %v430 = vrsqrt.pop %v426
    %v431 = vrsqrt.pop %v427
    %v432 = vrsqrt.pop %v428
    %v433 = vmul.f32 %v417, %v429
    %v434 = vmul.f32 %v418, %v429
    %v435 = vmul.f32 %v419, %v430
    %v436 = vmul.f32 %v420, %v430
    %v437 = vmul.f32 %v421, %v431
    %v438 = vmul.f32 %v422, %v431
    %v439 = vmul.f32 %v423, %v432
    %v440 = vmul.f32 %v424, %v432
    %v441 = vadd.f32 %v433, %v231
    %v442 = vadd.f32 %v434, %v232
    %v443 = vadd.f32 %v435, %v233
    %v444 = vadd.f32 %v436, %v234
    %v445 = vadd.f32 %v437, %v235
    %v446 = vadd.f32 %v438, %v236
    %v447 = vadd.f32 %v439, %v237
    %v448 = vadd.f32 %v440, %v238
    %v449 = vld [vmem:[#allocation2 + $0xc8] sm:$0xff]
    %v450 = vld [vmem:[#allocation2 + $0xd0] sm:$0xff]
    %v451 = vld [vmem:[#allocation2 + $0xd8] sm:$0xff]
    %v452 = vld [vmem:[#allocation2 + $0xe0] sm:$0xff]
    %453 = vset.pattern.permute.xlu0 6
    %454 = vperm.xlu0 %453, %v29
    %v455 = vpop.permute.xlu0 %454
    %457 = vset.pattern.permute.xlu0 6
    %458 = vperm.xlu0 %457, %v30
    %v459 = vpop.permute.xlu0 %458
    %461 = vset.pattern.permute.xlu0 6
    %462 = vperm.xlu0 %461, %v31
    %v463 = vpop.permute.xlu0 %462
    %465 = vset.pattern.permute.xlu0 6
    %466 = vperm.xlu0 %465, %v32
    %v467 = vpop.permute.xlu0 %466
    %v470 = vsel %vm259, %v449, 0
    %v473 = vsel %vm259, %v450, 0
    %v476 = vsel %vm259, %v451, 0
    %v479 = vsel %vm259, %v452, 0
    %481 = vmatprep.subr.mxu0 %v442
    %482 = vmatpush1.msra.mxu0 %v441
    %483 = vmatprep.subr.mxu0 %v444
    %484 = vmatpush1.msra.mxu0 %v443
    %485 = vmatprep.subr.mxu0 %v446
    %486 = vmatpush1.msra.mxu0 %v445
    %487 = vmatprep.subr.mxu0 %v448
    %488 = vmatpush1.msra.mxu0 %v447
    %489 = vmatprep.subr.mxu0 0.0
    %490 = vmatpush1.msra.mxu0 0.0
    %491 = vmatprep.subr.mxu0 0.0
    %492 = vmatpush1.msra.mxu0 0.0
    %493 = vmatprep.subr.mxu0 0.0
    %494 = vmatpush1.msra.mxu0 0.0
    %495 = vmatprep.subr.mxu0 0.0
    %496 = vmatpush1.msra.mxu0 0.0
    %497 = vmatprep.subr.mxu0 0.0
    %498 = vmatpush1.msra.mxu0 0.0
    %499 = vmatprep.subr.mxu0 0.0
    %500 = vmatpush1.msra.mxu0 0.0
    %501 = vmatprep.subr.mxu0 0.0
    %502 = vmatpush1.msra.mxu0 0.0
    %503 = vmatprep.subr.mxu0 0.0
    %504 = vmatpush1.msra.mxu0 0.0
    %505 = vmatprep.subr.mxu0 0.0
    %506 = vmatpush1.msra.mxu0 0.0
    %507 = vmatprep.subr.mxu0 0.0
    %508 = vmatpush1.msra.mxu0 0.0
    %509 = vmatprep.subr.mxu0 0.0
    %510 = vmatpush1.msra.mxu0 0.0
    %511 = vmatprep.subr.mxu0 0.0
    %512 = vmatpush1.msra.mxu0 0.0
    %513 = vmatprep.subr.mxu0 0.0
    %514 = vmatpush1.msra.mxu0 0.0
    %515 = vmatprep.subr.mxu0 0.0
    %516 = vmatpush1.msra.mxu0 0.0
    %517 = vmatprep.subr.mxu0 0.0
    %518 = vmatpush1.msra.mxu0 0.0
    %519 = vmatprep.subr.mxu0 0.0
    %520 = vmatpush1.msra.mxu0 0.0
    %521 = vmatprep.subr.mxu0 0.0
    %522 = vmatpush1.msra.mxu0 0.0
    %523 = vmatprep.subr.mxu0 0.0
    %524 = vmatpush1.msra.mxu0 0.0
    %525 = vmatprep.subr.mxu0 0.0
    %526 = vmatpush1.msra.mxu0 0.0
    %527 = vmatprep.subr.mxu0 0.0
    %528 = vmatpush1.msra.mxu0 0.0
    %529 = vmatprep.subr.mxu0 0.0
    %530 = vmatpush1.msra.mxu0 0.0
    %531 = vmatprep.subr.mxu0 0.0
    %532 = vmatpush1.msra.mxu0 0.0
    %533 = vmatprep.subr.mxu0 0.0
    %534 = vmatpush1.msra.mxu0 0.0
    %535 = vmatprep.subr.mxu0 0.0
    %536 = vmatpush1.msra.mxu0 0.0
    %537 = vmatprep.subr.mxu0 0.0
    %538 = vmatpush1.msra.mxu0 0.0
    %539 = vmatprep.subr.mxu0 0.0
    %540 = vmatpush1.msra.mxu0 0.0
    %541 = vmatprep.subr.mxu0 0.0
    %542 = vmatpush1.msra.mxu0 0.0
    %543 = vmatprep.subr.mxu0 0.0
    %544 = vmatpush1.msra.mxu0 0.0
    %545 = vmatprep.mubr.f32.mxu0 0.0
    %546 = vmatmul.mubr.f32.gmra.mrb[0].mxu0 %v470
    %v547 = vpop.f32.mrb[0].mxu0
    %v548 = vadd.f32 %v455, %v547
    %v549 = vpop.f32.mrb[0].mxu0
    %v550 = vadd.f32 %v455, %v549
    %551 = vmatprep.mubr.f32.mxu0 0.0
    %552 = vmatmul.mubr.f32.gmra.mrb[0].mxu0 %v473
    %v553 = vpop.f32.mrb[0].mxu0
    %v554 = vadd.f32 %v459, %v553
    %v555 = vpop.f32.mrb[0].mxu0
    %v556 = vadd.f32 %v459, %v555
    %557 = vmatprep.mubr.f32.mxu0 0.0
    %558 = vmatmul.mubr.f32.gmra.mrb[0].mxu0 %v476
    %v559 = vpop.f32.mrb[0].mxu0
    %v560 = vadd.f32 %v463, %v559
    %v561 = vpop.f32.mrb[0].mxu0
    %v562 = vadd.f32 %v463, %v561
    %563 = vmatprep.mubr.f32.mxu0 0.0
    %564 = vmatmul.mubr.f32.gmra.mrb[0].mxu0 %v479
    %v565 = vpop.f32.mrb[0].mxu0
    %v566 = vadd.f32 %v467, %v565
    %v567 = vpop.f32.mrb[0].mxu0
    %v568 = vadd.f32 %v467, %v567
    %569 = vdwg.mxu0
    %v570 = vmax.f32 %v548, 0.0
    %v571 = vmax.f32 %v550, 0.0
    %v572 = vmax.f32 %v554, 0.0
    %v573 = vmax.f32 %v556, 0.0
    %v574 = vmax.f32 %v560, 0.0
    %v575 = vmax.f32 %v562, 0.0
    %v576 = vmax.f32 %v566, 0.0
    %v577 = vmax.f32 %v568, 0.0
    %v578 = vadd.f32 %v570, %v571
    %579 = vadd.xlane.f32.xlu0 %v578
    %v580 = vpop.xlane.xlu0 %579
    %v581 = vadd.f32 %v572, %v573
    %582 = vadd.xlane.f32.xlu0 %v581
    %v583 = vpop.xlane.xlu0 %582
    %v584 = vadd.f32 %v574, %v575
    %585 = vadd.xlane.f32.xlu0 %v584
    %v586 = vpop.xlane.xlu0 %585
    %v587 = vadd.f32 %v576, %v577
    %588 = vadd.xlane.f32.xlu0 %v587
    %v589 = vpop.xlane.xlu0 %588
    %v590 = vmul.f32 %v570, %v570
    %v591 = vmul.f32 %v571, %v571
    %v592 = vmul.f32 %v572, %v572
    %v593 = vmul.f32 %v573, %v573
    %v594 = vmul.f32 %v574, %v574
    %v595 = vmul.f32 %v575, %v575
    %v596 = vmul.f32 %v576, %v576
    %v597 = vmul.f32 %v577, %v577
    %v598 = vadd.f32 %v590, %v591
    %599 = vadd.xlane.f32.xlu0 %v598
    %v600 = vpop.xlane.xlu0 %599
    %v601 = vadd.f32 %v592, %v593
    %602 = vadd.xlane.f32.xlu0 %v601
    %v603 = vpop.xlane.xlu0 %602
    %v604 = vadd.f32 %v594, %v595
    %605 = vadd.xlane.f32.xlu0 %v604
    %v606 = vpop.xlane.xlu0 %605
    %v607 = vadd.f32 %v596, %v597
    %608 = vadd.xlane.f32.xlu0 %v607
    %v609 = vpop.xlane.xlu0 %608
    %v610 = vmul.f32 %v580, 0.00390625
    %v611 = vmul.f32 %v583, 0.00390625
    %v612 = vmul.f32 %v586, 0.00390625
    %v613 = vmul.f32 %v589, 0.00390625
    %v614 = vmul.f32 %v600, 0.00390625
    %v615 = vmul.f32 %v603, 0.00390625
    %v616 = vmul.f32 %v606, 0.00390625
    %v617 = vmul.f32 %v609, 0.00390625
    %v618 = vmul.f32 %v610, %v610
    %v619 = vmul.f32 %v611, %v611
    %v620 = vmul.f32 %v612, %v612
    %v621 = vmul.f32 %v613, %v613
    %v622 = vsub.f32 %v614, %v618
    %v623 = vsub.f32 %v615, %v619
    %v624 = vsub.f32 %v616, %v620
    %v625 = vsub.f32 %v617, %v621
    %v626 = vsub.f32 %v570, %v610
    %v627 = vsub.f32 %v571, %v610
    %v628 = vsub.f32 %v572, %v611
    %v629 = vsub.f32 %v573, %v611
    %v630 = vsub.f32 %v574, %v612
    %v631 = vsub.f32 %v575, %v612
    %v632 = vsub.f32 %v576, %v613
    %v633 = vsub.f32 %v577, %v613
    %v634 = vadd.f32 %v622, 1e-05
    %v635 = vadd.f32 %v623, 1e-05
    %v636 = vadd.f32 %v624, 1e-05
    %v637 = vadd.f32 %v625, 1e-05
    %v638 = vrsqrt.pop %v634
    %v639 = vrsqrt.pop %v635
    %v640 = vrsqrt.pop %v636
    %v641 = vrsqrt.pop %v637
    %v642 = vmul.f32 %v626, %v638
    %v643 = vmul.f32 %v627, %v638
    %v644 = vmul.f32 %v628, %v639
    %v645 = vmul.f32 %v629, %v639
    %v646 = vmul.f32 %v630, %v640
    %v647 = vmul.f32 %v631, %v640
    %v648 = vmul.f32 %v632, %v641
    %v649 = vmul.f32 %v633, %v641
    %v650 = vld [vmem:[#allocation2 + $0xe8] sm:$0xff]
    %v651 = vld [vmem:[#allocation2 + $0xf0] sm:$0xff]
    %v652 = vld [vmem:[#allocation2 + $0xf8] sm:$0xff]
    %v653 = vld [vmem:[#allocation2 + $0x100] sm:$0xff]
    %654 = vset.pattern.permute.xlu0 7
    %655 = vperm.xlu0 %654, %v29
    %v656 = vpop.permute.xlu0 %655
    %658 = vset.pattern.permute.xlu0 7
    %659 = vperm.xlu0 %658, %v30
    %v660 = vpop.permute.xlu0 %659
    %662 = vset.pattern.permute.xlu0 7
    %663 = vperm.xlu0 %662, %v31
    %v664 = vpop.permute.xlu0 %663
    %666 = vset.pattern.permute.xlu0 7
    %667 = vperm.xlu0 %666, %v32
    %v668 = vpop.permute.xlu0 %667
    %v671 = vsel %vm259, %v650, 0
    %v674 = vsel %vm259, %v651, 0
    %v677 = vsel %vm259, %v652, 0
    %v680 = vsel %vm259, %v653, 0
    %682 = vmatprep.subr.mxu0 %v643
    %683 = vmatpush1.msra.mxu0 %v642
    %684 = vmatprep.subr.mxu0 %v645
    %685 = vmatpush1.msra.mxu0 %v644
    %686 = vmatprep.subr.mxu0 %v647
    %687 = vmatpush1.msra.mxu0 %v646
    %688 = vmatprep.subr.mxu0 %v649
    %689 = vmatpush1.msra.mxu0 %v648
    %690 = vmatprep.subr.mxu0 0.0
    %691 = vmatpush1.msra.mxu0 0.0
    %692 = vmatprep.subr.mxu0 0.0
    %693 = vmatpush1.msra.mxu0 0.0
    %694 = vmatprep.subr.mxu0 0.0
    %695 = vmatpush1.msra.mxu0 0.0
    %696 = vmatprep.subr.mxu0 0.0
    %697 = vmatpush1.msra.mxu0 0.0
    %698 = vmatprep.subr.mxu0 0.0
    %699 = vmatpush1.msra.mxu0 0.0
    %700 = vmatprep.subr.mxu0 0.0
    %701 = vmatpush1.msra.mxu0 0.0
    %702 = vmatprep.subr.mxu0 0.0
    %703 = vmatpush1.msra.mxu0 0.0
    %704 = vmatprep.subr.mxu0 0.0
    %705 = vmatpush1.msra.mxu0 0.0
    %706 = vmatprep.subr.mxu0 0.0
    %707 = vmatpush1.msra.mxu0 0.0
    %708 = vmatprep.subr.mxu0 0.0
    %709 = vmatpush1.msra.mxu0 0.0
    %710 = vmatprep.subr.mxu0 0.0
    %711 = vmatpush1.msra.mxu0 0.0
    %712 = vmatprep.subr.mxu0 0.0
    %713 = vmatpush1.msra.mxu0 0.0
    %714 = vmatprep.subr.mxu0 0.0
    %715 = vmatpush1.msra.mxu0 0.0
    %716 = vmatprep.subr.mxu0 0.0
    %717 = vmatpush1.msra.mxu0 0.0
    %718 = vmatprep.subr.mxu0 0.0
    %719 = vmatpush1.msra.mxu0 0.0
    %720 = vmatprep.subr.mxu0 0.0
    %721 = vmatpush1.msra.mxu0 0.0
    %722 = vmatprep.subr.mxu0 0.0
    %723 = vmatpush1.msra.mxu0 0.0
    %724 = vmatprep.subr.mxu0 0.0
    %725 = vmatpush1.msra.mxu0 0.0
    %726 = vmatprep.subr.mxu0 0.0
    %727 = vmatpush1.msra.mxu0 0.0
    %728 = vmatprep.subr.mxu0 0.0
    %729 = vmatpush1.msra.mxu0 0.0
    %730 = vmatprep.subr.mxu0 0.0
    %731 = vmatpush1.msra.mxu0 0.0
    %732 = vmatprep.subr.mxu0 0.0
    %733 = vmatpush1.msra.mxu0 0.0
    %734 = vmatprep.subr.mxu0 0.0
    %735 = vmatpush1.msra.mxu0 0.0
    %736 = vmatprep.subr.mxu0 0.0
    %737 = vmatpush1.msra.mxu0 0.0
    %738 = vmatprep.subr.mxu0 0.0
    %739 = vmatpush1.msra.mxu0 0.0
    %740 = vmatprep.subr.mxu0 0.0
    %741 = vmatpush1.msra.mxu0 0.0
    %742 = vmatprep.subr.mxu0 0.0
    %743 = vmatpush1.msra.mxu0 0.0
    %744 = vmatprep.subr.mxu0 0.0
    %745 = vmatpush1.msra.mxu0 0.0
    %746 = vmatprep.mubr.f32.mxu0 0.0
    %747 = vmatmul.mubr.f32.gmra.mrb[0].mxu0 %v671
    %v748 = vpop.f32.mrb[0].mxu0
    %v749 = vadd.f32 %v656, %v748
    %v750 = vpop.f32.mrb[0].mxu0
    %v751 = vadd.f32 %v656, %v750
    %752 = vmatprep.mubr.f32.mxu0 0.0
    %753 = vmatmul.mubr.f32.gmra.mrb[0].mxu0 %v674
    %v754 = vpop.f32.mrb[0].mxu0
    %v755 = vadd.f32 %v660, %v754
    %v756 = vpop.f32.mrb[0].mxu0
    %v757 = vadd.f32 %v660, %v756
    %758 = vmatprep.mubr.f32.mxu0 0.0
    %759 = vmatmul.mubr.f32.gmra.mrb[0].mxu0 %v677
    %v760 = vpop.f32.mrb[0].mxu0
    %v761 = vadd.f32 %v664, %v760
    %v762 = vpop.f32.mrb[0].mxu0
    %v763 = vadd.f32 %v664, %v762
    %764 = vmatprep.mubr.f32.mxu0 0.0
    %765 = vmatmul.mubr.f32.gmra.mrb[0].mxu0 %v680
    %v766 = vpop.f32.mrb[0].mxu0
    %v767 = vadd.f32 %v668, %v766
    %v768 = vpop.f32.mrb[0].mxu0
    %v769 = vadd.f32 %v668, %v768
    %770 = vdwg.mxu0
    %v771 = vmax.f32 %v749, 0.0
    %v772 = vmax.f32 %v751, 0.0
    %v773 = vmax.f32 %v755, 0.0
    %v774 = vmax.f32 %v757, 0.0
    %v775 = vmax.f32 %v761, 0.0
    %v776 = vmax.f32 %v763, 0.0
    %v777 = vmax.f32 %v767, 0.0
    %v778 = vmax.f32 %v769, 0.0
    %v779 = vadd.f32 %v771, %v772
    %780 = vadd.xlane.f32.xlu0 %v779
    %v781 = vpop.xlane.xlu0 %780
    %v782 = vadd.f32 %v773, %v774
    %783 = vadd.xlane.f32.xlu0 %v782
    %v784 = vpop.xlane.xlu0 %783
    %v785 = vadd.f32 %v775, %v776
    %786 = vadd.xlane.f32.xlu0 %v785
    %v787 = vpop.xlane.xlu0 %786
    %v788 = vadd.f32 %v777, %v778
    %789 = vadd.xlane.f32.xlu0 %v788
    %v790 = vpop.xlane.xlu0 %789
    %v791 = vmul.f32 %v771, %v771
    %v792 = vmul.f32 %v772, %v772
    %v793 = vmul.f32 %v773, %v773
    %v794 = vmul.f32 %v774, %v774
    %v795 = vmul.f32 %v775, %v775
    %v796 = vmul.f32 %v776, %v776
    %v797 = vmul.f32 %v777, %v777
    %v798 = vmul.f32 %v778, %v778
    %v799 = vadd.f32 %v791, %v792
    %800 = vadd.xlane.f32.xlu0 %v799
    %v801 = vpop.xlane.xlu0 %800
    %v802 = vadd.f32 %v793, %v794
    %803 = vadd.xlane.f32.xlu0 %v802
    %v804 = vpop.xlane.xlu0 %803
    %v805 = vadd.f32 %v795, %v796
    %806 = vadd.xlane.f32.xlu0 %v805
    %v807 = vpop.xlane.xlu0 %806
    %v808 = vadd.f32 %v797, %v798
    %809 = vadd.xlane.f32.xlu0 %v808
    %v810 = vpop.xlane.xlu0 %809
    %v811 = vmul.f32 %v781, 0.00390625
    %v812 = vmul.f32 %v784, 0.00390625
    %v813 = vmul.f32 %v787, 0.00390625
    %v814 = vmul.f32 %v790, 0.00390625
    %v815 = vmul.f32 %v801, 0.00390625
    %v816 = vmul.f32 %v804, 0.00390625
    %v817 = vmul.f32 %v807, 0.00390625
    %v818 = vmul.f32 %v810, 0.00390625
    %v819 = vmul.f32 %v811, %v811
    %v820 = vmul.f32 %v812, %v812
    %v821 = vmul.f32 %v813, %v813
    %v822 = vmul.f32 %v814, %v814
    %v823 = vsub.f32 %v815, %v819
    %v824 = vsub.f32 %v816, %v820
    %v825 = vsub.f32 %v817, %v821
    %v826 = vsub.f32 %v818, %v822
    %v827 = vsub.f32 %v771, %v811
    %v828 = vsub.f32 %v772, %v811
    %v829 = vsub.f32 %v773, %v812
    %v830 = vsub.f32 %v774, %v812
    %v831 = vsub.f32 %v775, %v813
    %v832 = vsub.f32 %v776, %v813
    %v833 = vsub.f32 %v777, %v814
    %v834 = vsub.f32 %v778, %v814
    %v835 = vadd.f32 %v823, 1e-05
    %v836 = vadd.f32 %v824, 1e-05
    %v837 = vadd.f32 %v825, 1e-05
    %v838 = vadd.f32 %v826, 1e-05
    %v839 = vrsqrt.pop %v835
    %v840 = vrsqrt.pop %v836
    %v841 = vrsqrt.pop %v837
    %v842 = vrsqrt.pop %v838
    %v843 = vmul.f32 %v827, %v839
    %v844 = vmul.f32 %v828, %v839
    %v845 = vmul.f32 %v829, %v840
    %v846 = vmul.f32 %v830, %v840
    %v847 = vmul.f32 %v831, %v841
    %v848 = vmul.f32 %v832, %v841
    %v849 = vmul.f32 %v833, %v842
    %v850 = vmul.f32 %v834, %v842
    %v851 = vadd.f32 %v843, %v642
    %v852 = vadd.f32 %v844, %v643
    %v853 = vadd.f32 %v845, %v644
    %v854 = vadd.f32 %v846, %v645
    %v855 = vadd.f32 %v847, %v646
    %v856 = vadd.f32 %v848, %v647
    %v857 = vadd.f32 %v849, %v648
    %v858 = vadd.f32 %v850, %v649
    %859 = vset.pattern.permute.xlu0 3
    %860 = vperm.xlu0 %859, %v29
    %v861 = vpop.permute.xlu0 %860
    %863 = vset.pattern.permute.xlu0 3
    %864 = vperm.xlu0 %863, %v30
    %v865 = vpop.permute.xlu0 %864
    %867 = vset.pattern.permute.xlu0 3
    %868 = vperm.xlu0 %867, %v31
    %v869 = vpop.permute.xlu0 %868
    %871 = vset.pattern.permute.xlu0 3
    %872 = vperm.xlu0 %871, %v32
    %v873 = vpop.permute.xlu0 %872
    %v875 = vmul.f32 %v851, %v861
    %v876 = vmul.f32 %v852, %v861
    %v877 = vmul.f32 %v853, %v865
    %v878 = vmul.f32 %v854, %v865
    %v879 = vmul.f32 %v855, %v869
    %v880 = vmul.f32 %v856, %v869
    %v881 = vmul.f32 %v857, %v873
    %v882 = vmul.f32 %v858, %v873
    %v883 = vadd.f32 %v875, %v877
    %v884 = vadd.f32 %v883, %v879
    %v885 = vadd.f32 %v884, %v881
    %v886 = vrot.slane %v885, 4
    %v887 = vadd.f32 %v885, %v886
    %v888 = vrot.slane %v887, 2
    %v889 = vadd.f32 %v887, %v888
    %v890 = vrot.slane %v889, 1
    %v891 = vadd.f32 %v889, %v890
    %v892 = vadd.f32 %v876, %v878
    %v893 = vadd.f32 %v892, %v880
    %v894 = vadd.f32 %v893, %v882
    %v895 = vrot.slane %v894, 4
    %v896 = vadd.f32 %v894, %v895
    %v897 = vrot.slane %v896, 2
    %v898 = vadd.f32 %v896, %v897
    %v899 = vrot.slane %v898, 1
    %v900 = vadd.f32 %v898, %v899
    %902 = vset.pattern.permute.xlu0 8
    %903 = vperm.xlu0 %902, %v33
    %v904 = vpop.permute.xlu0 %903
    %v906 = vadd.f32 %v891, %v904
    %v907 = vadd.f32 %v900, %v904
    %v908 = vmax.f32 %v906, 0.0
    %v909 = vmax.f32 %v907, 0.0
    %vm910 = vcmask 1040384
    %v911 = vsel %vm910, %v908, 0.0
    %v912 = vsel %vm910, %v909, 0.0
    %v913 = vadd.f32 %v911, %v912
    %914 = vadd.xlane.f32.xlu0 %v913
    %v915 = vpop.xlane.xlu0 %914
    %v916 = vmul.f32 %v908, %v908
    %v917 = vmul.f32 %v909, %v909
    %v918 = vsel %vm910, %v916, 0.0
    %v919 = vsel %vm910, %v917, 0.0
    %v920 = vadd.f32 %v918, %v919
    %921 = vadd.xlane.f32.xlu0 %v920
    %v922 = vpop.xlane.xlu0 %921
    %v923 = vmul.f32 %v915, 0.00390625
    %v924 = vmul.f32 %v922, 0.00390625
    %v925 = vmul.f32 %v923, %v923
    %v926 = vsub.f32 %v924, %v925
    %v927 = vsub.f32 %v908, %v923
    %v928 = vsub.f32 %v909, %v923
    %v929 = vadd.f32 %v926, 1e-05
    %v930 = vrsqrt.pop %v929
    %v931 = vmul.f32 %v927, %v930
    %v932 = vmul.f32 %v928, %v930
    %v933 = vld [vmem:[#allocation2] sm:$0xff]
    %v934 = vld [vmem:[#allocation2 + $0x8] sm:$0xff]
    %v935 = vld [vmem:[#allocation2 + $0x10] sm:$0xff]
    %v936 = vld [vmem:[#allocation2 + $0x18] sm:$0xff]
    %v937 = vld [vmem:[#allocation2 + $0x20] sm:$0xff]
    %v938 = vld [vmem:[#allocation2 + $0x28] sm:$0xff]
    %v939 = vld [vmem:[#allocation2 + $0x30] sm:$0xff]
    %v940 = vld [vmem:[#allocation2 + $0x38] sm:$0xff]
    %v941 = vld [vmem:[#allocation2 + $0x40] sm:$0xff]
    %v942 = vld [vmem:[#allocation2 + $0x48] sm:$0xff]
    %v943 = vld [vmem:[#allocation2 + $0x50] sm:$0xff]
    %v944 = vld [vmem:[#allocation2 + $0x58] sm:$0xff]
    %v945 = vld [vmem:[#allocation2 + $0x60] sm:$0xff]
    %v946 = vld [vmem:[#allocation2 + $0x68] sm:$0xff]
    %v947 = vld [vmem:[#allocation2 + $0x70] sm:$0xff]
    %v948 = vld [vmem:[#allocation2 + $0x78] sm:$0xff]
    %v949 = vld [vmem:[#allocation2 + $0x80] sm:$0x1]
    %950 = vmatprep.subr.mxu0 0.0
    %951 = vmatpush1.msra.mxu0 %v933
    %952 = vmatprep.subr.mxu0 0.0
    %953 = vmatpush1.msra.mxu0 %v934
    %954 = vmatprep.subr.mxu0 0.0
    %955 = vmatpush1.msra.mxu0 %v935
    %956 = vmatprep.subr.mxu0 0.0
    %957 = vmatpush1.msra.mxu0 %v936
    %958 = vmatprep.subr.mxu0 0.0
    %959 = vmatpush1.msra.mxu0 %v937
    %960 = vmatprep.subr.mxu0 0.0
    %961 = vmatpush1.msra.mxu0 %v938
    %962 = vmatprep.subr.mxu0 0.0
    %963 = vmatpush1.msra.mxu0 %v939
    %964 = vmatprep.subr.mxu0 0.0
    %965 = vmatpush1.msra.mxu0 %v940
    %966 = vmatprep.subr.mxu0 0.0
    %967 = vmatpush1.msra.mxu0 %v941
    %968 = vmatprep.subr.mxu0 0.0
    %969 = vmatpush1.msra.mxu0 %v942
    %970 = vmatprep.subr.mxu0 0.0
    %971 = vmatpush1.msra.mxu0 %v943
    %972 = vmatprep.subr.mxu0 0.0
    %973 = vmatpush1.msra.mxu0 %v944
    %974 = vmatprep.subr.mxu0 0.0
    %975 = vmatpush1.msra.mxu0 %v945
    %976 = vmatprep.subr.mxu0 0.0
    %977 = vmatpush1.msra.mxu0 %v946
    %978 = vmatprep.subr.mxu0 0.0
    %979 = vmatpush1.msra.mxu0 %v947
    %980 = vmatprep.subr.mxu0 0.0
    %981 = vmatpush1.msra.mxu0 %v948
    %982 = vmatprep.subr.mxu0 0.0
    %983 = vmatpush1.msra.mxu0 0.0
    %984 = vmatprep.subr.mxu0 0.0
    %985 = vmatpush1.msra.mxu0 0.0
    %986 = vmatprep.subr.mxu0 0.0
    %987 = vmatpush1.msra.mxu0 0.0
    %988 = vmatprep.subr.mxu0 0.0
    %989 = vmatpush1.msra.mxu0 0.0
    %990 = vmatprep.subr.mxu0 0.0
    %991 = vmatpush1.msra.mxu0 0.0
    %992 = vmatprep.subr.mxu0 0.0
    %993 = vmatpush1.msra.mxu0 0.0
    %994 = vmatprep.subr.mxu0 0.0
    %995 = vmatpush1.msra.mxu0 0.0
    %996 = vmatprep.subr.mxu0 0.0
    %997 = vmatpush1.msra.mxu0 0.0
    %998 = vmatprep.subr.mxu0 0.0
    %999 = vmatpush1.msra.mxu0 0.0
    %1000 = vmatprep.subr.mxu0 0.0
    %1001 = vmatpush1.msra.mxu0 0.0
    %1002 = vmatprep.subr.mxu0 0.0
    %1003 = vmatpush1.msra.mxu0 0.0
    %1004 = vmatprep.subr.mxu0 0.0
    %1005 = vmatpush1.msra.mxu0 0.0
    %1006 = vmatprep.subr.mxu0 0.0
    %1007 = vmatpush1.msra.mxu0 0.0
    %1008 = vmatprep.subr.mxu0 0.0
    %1009 = vmatpush1.msra.mxu0 0.0
    %1010 = vmatprep.subr.mxu0 0.0
    %1011 = vmatpush1.msra.mxu0 0.0
    %1012 = vmatprep.subr.mxu0 0.0
    %1013 = vmatpush1.msra.mxu0 0.0
    %1014 = vmatprep.mubr.f32.mxu0 0.0
    %1015 = vmatmul.mubr.f32.gmra.mrb[0].mxu0 %v931
    %v1016 = vpop.f32.mrb[0].mxu0
    %v1017 = vadd.f32 %v949, %v1016
    %v1018 = vpop.f32.mrb[0].mxu0
    %1019 = vdwg.mxu0
    %v1020 = vmax.f32 %v1017, 0.0
    %1021 = vmatprep.subr.mxu0 0.0
    %1022 = vmatpush1.msra.mxu0 %v933
    %1023 = vmatprep.subr.mxu0 0.0
    %1024 = vmatpush1.msra.mxu0 %v934
    %1025 = vmatprep.subr.mxu0 0.0
    %1026 = vmatpush1.msra.mxu0 %v935
    %1027 = vmatprep.subr.mxu0 0.0
    %1028 = vmatpush1.msra.mxu0 %v936
    %1029 = vmatprep.subr.mxu0 0.0
    %1030 = vmatpush1.msra.mxu0 %v937
    %1031 = vmatprep.subr.mxu0 0.0
    %1032 = vmatpush1.msra.mxu0 %v938
    %1033 = vmatprep.subr.mxu0 0.0
    %1034 = vmatpush1.msra.mxu0 %v939
    %1035 = vmatprep.subr.mxu0 0.0
    %1036 = vmatpush1.msra.mxu0 %v940
    %1037 = vmatprep.subr.mxu0 0.0
    %1038 = vmatpush1.msra.mxu0 %v941
    %1039 = vmatprep.subr.mxu0 0.0
    %1040 = vmatpush1.msra.mxu0 %v942
    %1041 = vmatprep.subr.mxu0 0.0
    %1042 = vmatpush1.msra.mxu0 %v943
    %1043 = vmatprep.subr.mxu0 0.0
    %1044 = vmatpush1.msra.mxu0 %v944
    %1045 = vmatprep.subr.mxu0 0.0
    %1046 = vmatpush1.msra.mxu0 %v945
    %1047 = vmatprep.subr.mxu0 0.0
    %1048 = vmatpush1.msra.mxu0 %v946
    %1049 = vmatprep.subr.mxu0 0.0
    %1050 = vmatpush1.msra.mxu0 %v947
    %1051 = vmatprep.subr.mxu0 0.0
    %1052 = vmatpush1.msra.mxu0 %v948
    %1053 = vmatprep.subr.mxu0 0.0
    %1054 = vmatpush1.msra.mxu0 0.0
    %1055 = vmatprep.subr.mxu0 0.0
    %1056 = vmatpush1.msra.mxu0 0.0
    %1057 = vmatprep.subr.mxu0 0.0
    %1058 = vmatpush1.msra.mxu0 0.0
    %1059 = vmatprep.subr.mxu0 0.0
    %1060 = vmatpush1.msra.mxu0 0.0
    %1061 = vmatprep.subr.mxu0 0.0
    %1062 = vmatpush1.msra.mxu0 0.0
    %1063 = vmatprep.subr.mxu0 0.0
    %1064 = vmatpush1.msra.mxu0 0.0
    %1065 = vmatprep.subr.mxu0 0.0
    %1066 = vmatpush1.msra.mxu0 0.0
    %1067 = vmatprep.subr.mxu0 0.0
    %1068 = vmatpush1.msra.mxu0 0.0
    %1069 = vmatprep.subr.mxu0 0.0
    %1070 = vmatpush1.msra.mxu0 0.0
    %1071 = vmatprep.subr.mxu0 0.0
    %1072 = vmatpush1.msra.mxu0 0.0
    %1073 = vmatprep.subr.mxu0 0.0
    %1074 = vmatpush1.msra.mxu0 0.0
    %1075 = vmatprep.subr.mxu0 0.0
    %1076 = vmatpush1.msra.mxu0 0.0
    %1077 = vmatprep.subr.mxu0 0.0
    %1078 = vmatpush1.msra.mxu0 0.0
    %1079 = vmatprep.subr.mxu0 0.0
    %1080 = vmatpush1.msra.mxu0 0.0
    %1081 = vmatprep.subr.mxu0 0.0
    %1082 = vmatpush1.msra.mxu0 0.0
    %1083 = vmatprep.subr.mxu0 0.0
    %1084 = vmatpush1.msra.mxu0 0.0
    %1085 = vmatprep.mubr.f32.mxu0 0.0
    %1086 = vmatmul.mubr.f32.gmra.mrb[0].mxu0 %v932
    %v1087 = vpop.f32.mrb[0].mxu0
    %v1088 = vadd.f32 %v949, %v1087
    %v1089 = vpop.f32.mrb[0].mxu0
    %1090 = vdwg.mxu0
    %v1091 = vmax.f32 %v1088, 0.0
    %v1092 = vmul.f32 %v1020, %v1020
    %v1093 = vadd.f32 %v1020, %v1091
    %v1094 = vmul.f32 %v1091, %v1091
    %v1095 = vadd.f32 %v1092, %v1094
    %v1096 = vmul.f32 %v1093, 0.5
    %v1097 = vmul.f32 %v1095, 0.5
    %v1098 = vmul.f32 %v1096, %v1096
    %v1099 = vsub.f32 %v1097, %v1098
    %v1100 = vadd.f32 %v1099, 1e-05
    %v1101 = vrsqrt.pop %v1100
    %v1102 = vsub.f32 %v1020, %v1096
    %v1103 = vmul.f32 %v1102, %v1101
    %1104 = vst [vmem:[#allocation5] sm:$0x1] %v1103
    %v1105 = vsub.f32 %v1091, %v1096
    %v1106 = vmul.f32 %v1105, %v1101
    %1107 = vst [vmem:[#allocation5 + $0x1] sm:$0x1] %v1106
    // Predicated region
    $region14: #{tpu_custom_call.1} parent=1 // pred_check
      _
    $region15: #{tpu_custom_call.1} parent=1 // pred_check_branch
      %1109 = sbr.rel (0) target = $region17
    $region16: #{tpu_custom_call.1} parent=1 // pred_region
      %s1111 = ssub.s32 32, 32
      %1112 = vsyncadd [#allocation4], %s1111
      %s1114 = sshll.u32 [#allocation5], 4
      %s1115 = int_to_ptr.vmem [resolvable:$true] %s1114
      %1117 = dma.vmem_to_hbm [thread:$0]  %s1115, 32, %s2, [#allocation4]
    $region17: #{tpu_custom_call.1} parent=1 // pred_fallthru
      _
    // Predicated region
    $region18: #{tpu_custom_call.1} parent=1 // pred_check
      _
    $region19: #{tpu_custom_call.1} parent=1 // pred_check_branch
      %1119 = sbr.rel (0) target = $region21
    $region20: #{tpu_custom_call.1} parent=1 // pred_region
      %1120 = dma.done [#allocation4], 32
    $region21: #{tpu_custom_call.1} parent=1 // pred_fallthru
      _
    %1121 = vsyncpa [#allocation3], 1
    %1122 = vsyncpa [#allocation4], 1

</llo_original>
